<compile_context>
chip_gen: v5e
topology: v5e:2x2
jax: 0.10.0
libtpu: 0.0.40
codegen_flags: <defaults>
</compile_context>

<pallas_src>
import math

import jax
import jax.numpy as jnp
from jax.experimental import pallas as pl
from jax.experimental.pallas import tpu as pltpu


def _round_up(a, m):
    return (a + m - 1) // m * m


def _projector_kernel(gxc_ref, gyc_ref, cx_ref, cy_ref, out_ref):
    # Grid: (batch b, output-row tile i, atom tile k); k is the reduction axis.
    k = pl.program_id(2)

    @pl.when(k == 0)
    def _():
        out_ref[...] = jnp.zeros_like(out_ref)

    # x-factor: atoms on sublanes, pixel-x on lanes.
    #   gx[a, j] = w_a * exp(-inv_a * (x_j - xm_a)^2) = exp((a*x + b)*x + c)
    a_c = gxc_ref[:, 0:1]                       # (TA, 1)  -inv
    b_c = gxc_ref[:, 1:2]                       # (TA, 1)  2*inv*xm
    c_c = gxc_ref[:, 2:3]                       # (TA, 1)  -inv*xm^2 + log(w)
    xr = cx_ref[...]                            # (1, Sx)
    gx = jnp.exp((a_c * xr + b_c) * xr + c_c).astype(jnp.bfloat16)   # (TA, Sx)

    # y-factor: pixel-y on sublanes, atoms on lanes (lane-dense constants).
    a_r = gyc_ref[0:1, :]                       # (1, TA)  -inv
    b_r = gyc_ref[1:2, :]                       # (1, TA)  2*inv*ym
    c_r = gyc_ref[2:3, :]                       # (1, TA)  -inv*ym^2
    yc = cy_ref[...]                            # (TM, 1)
    gy = jnp.exp((a_r * yc + b_r) * yc + c_r).astype(jnp.bfloat16)   # (TM, TA)

    # img_tile[i, j] += sum_a gy[i, a] * gx[a, j]  — bf16 operands, f32 accumulate
    out_ref[...] += jax.lax.dot_general(
        gy, gx,
        dimension_numbers=(((1,), (0,)), ((), ())),
        preferred_element_type=jnp.float32)


def make_projector(side_len, resolution, stds, densities):
    """Returns forward(mol: (B, n_atoms, >=2)) -> (B, side_len, side_len)."""
    S = int(side_len)
    x_max = (S - 1) * resolution / 2.0
    coord = (jnp.arange(S, dtype=jnp.float32) * jnp.float32(resolution)
             - jnp.float32(x_max))                                   # (S,)

    # Lane-dense padding of the image: rows -> mult of 8, cols -> mult of 128.
    Sy = _round_up(S, 8)
    Sx = _round_up(S, 128)
    cx2d = jnp.zeros((1, Sx), jnp.float32).at[0, :S].set(coord)      # x coords
    cy2d = jnp.zeros((Sy, 1), jnp.float32).at[:S, 0].set(coord)      # y coords

    stds = jnp.asarray(stds, jnp.float32)
    densities = jnp.asarray(densities, jnp.float32)
    var = stds * stds
    inv = 0.5 / var                                                  # (A,)
    logw = jnp.log(densities) - jnp.log(2.0 * math.pi * var)         # log weight
    n_atoms = int(stds.shape[0])

    # Atom (reduction) tiling: single tile when small, else 256-wide tiles
    # (aligned to the 256-deep MXU on v6e/v7x, modest VMEM temporaries on v7x).
    na8 = _round_up(n_atoms, 8)
    if na8 <= 256:
        NA = TA = na8
    else:
        NA = _round_up(n_atoms, 256)
        TA = 256
    pad_a = NA - n_atoms

    # Padded atoms: a=0, b=0; c_x=-1e30 -> gx=0 (zero contribution), c_y=0.
    inv_p = jnp.pad(inv, (0, pad_a)) if pad_a else inv
    logw_p = (jnp.pad(logw, (0, pad_a), constant_values=-1e30)
              if pad_a else logw)

    def forward(mol):
        mol = jnp.asarray(mol, jnp.float32)
        B = mol.shape[0]
        xm = mol[:, :, 0]
        ym = mol[:, :, 1]                                            # z ignored
        if pad_a:
            xm = jnp.pad(xm, ((0, 0), (0, pad_a)))
            ym = jnp.pad(ym, ((0, 0), (0, pad_a)))

        # Horner coefficients of the per-atom 1-D log-Gaussian factors
        # (tiny O(B*NA) prep; removes per-pixel sub/square + post-exp *w).
        a = -inv_p                                                   # (NA,)
        a_b = jnp.broadcast_to(a, (B, NA))
        bx = 2.0 * inv_p * xm                                        # (B, NA)
        cxc = -inv_p * xm * xm + logw_p                              # weight folded
        by = 2.0 * inv_p * ym
        cyc = -inv_p * ym * ym

        gx_coef = jnp.stack([a_b, bx, cxc], axis=-1)                 # (B, NA, 3)
        gy_coef = jnp.stack([a_b, by, cyc], axis=1)                  # (B, 3, NA)

        # Row tile: largest TM (multiple of 8, dividing Sy) whose TM-dependent
        # VMEM footprint fits a v7x-safe budget; keep >=2 parallel grid
        # iterations when B == 1 so both v7x TensorCores are used.
        budget = 16 * 1024 * 1024
        min_row_tiles = 1 if B >= 2 else 2

        def tm_bytes(tm):
            return (2 * tm * Sx * 4          # resident output block (2 bufs)
                    + 2 * tm * 128 * 4       # cy block (lane-padded)
                    + tm * TA * 6)           # gy temporaries (f32 + bf16)

        TM = 8
        for t in range(8, Sy + 1, 8):
            if (Sy % t == 0 and tm_bytes(t) <= budget
                    and Sy // t >= min_row_tiles):
                TM = t

        grid = (B, Sy // TM, NA // TA)
        grid_spec = pltpu.PrefetchScalarGridSpec(
            num_scalar_prefetch=0,
            grid=grid,
            in_specs=[
                pl.BlockSpec((None, TA, 3), lambda b, i, k: (b, k, 0)),  # gx coefs
                pl.BlockSpec((None, 3, TA), lambda b, i, k: (b, 0, k)),  # gy coefs
                pl.BlockSpec((1, Sx), lambda b, i, k: (0, 0)),           # x coords
                pl.BlockSpec((TM, 1), lambda b, i, k: (i, 0)),           # y coords
            ],
            out_specs=pl.BlockSpec((None, TM, Sx), lambda b, i, k: (b, i, 0)),
        )
        out = pl.pallas_call(
            _projector_kernel,
            grid_spec=grid_spec,
            out_shape=jax.ShapeDtypeStruct((B, Sy, Sx), jnp.float32),
            compiler_params=pltpu.CompilerParams(
                dimension_semantics=("parallel", "parallel", "arbitrary"),
                vmem_limit_bytes=48 * 1024 * 1024),
        )(gx_coef, gy_coef, cx2d, cy2d)
        return out[:, :S, :S]

    return forward


if __name__ == "__main__":
    # Small deterministic test shapes consistent with the module.
    B, n_atoms, side_len, resolution = 2, 64, 16, 1.0

    key = jax.random.PRNGKey(0)
    k1, k2, k3 = jax.random.split(key, 3)
    stds = 0.8 + 0.7 * jax.random.uniform(k1, (n_atoms,), dtype=jnp.float32)
    densities = 0.5 + jax.random.uniform(k2, (n_atoms,), dtype=jnp.float32)

    x_max = (side_len - 1) * resolution / 2.0
    mol = jax.random.uniform(k3, (B, n_atoms, 3), dtype=jnp.float32,
                             minval=-0.6 * x_max, maxval=0.6 * x_max)

    forward = make_projector(side_len, resolution, stds, densities)
    img = forward(mol)
    jax.block_until_ready(img)

    # Pure-JAX reference mirroring the torch module exactly (f32).
    coord = jnp.arange(side_len, dtype=jnp.float32) * resolution - x_max
    x = coord.reshape(1, 1, 1, side_len)
    y = coord.reshape(1, 1, side_len, 1)
    var = (stds ** 2).reshape(1, -1, 1, 1)
    dens = densities.reshape(1, -1, 1, 1)
    xm = mol[:, :, 0][:, :, None, None]
    ym = mol[:, :, 1][:, :, None, None]
    proj = (jnp.exp(-0.5 / var * (x - xm) ** 2)
            * jnp.exp(-0.5 / var * (y - ym) ** 2) / (2.0 * math.pi * var))
    img_ref = (proj * dens).sum(axis=1)

    assert img.shape == (B, side_len, side_len)
    err = float(jnp.max(jnp.abs(img - img_ref)))
    # bf16 MXU operands (f32 accumulation) -> ~0.5% relative error budget.
    assert jnp.allclose(img, img_ref, atol=2e-2, rtol=2e-2), f"max abs err {err}"
    print("KERNEL_OK")
</pallas_src>

<mosaic_0001>
module attributes {stable_mosaic.version = 11 : i64} {
  func.func @_projector_kernel(%arg0: i32, %arg1: i32, %arg2: i32, %arg3: memref<1x64x3xf32, #tpu.memory_space<vmem>>, %arg4: memref<1x3x64xf32, #tpu.memory_space<vmem>>, %arg5: memref<1x128xf32, #tpu.memory_space<vmem>>, %arg6: memref<16x1xf32, #tpu.memory_space<vmem>>, %arg7: memref<1x16x128xf32, #tpu.memory_space<vmem>>) attributes {dimension_semantics = [#tpu.dimension_semantics<parallel>, #tpu.dimension_semantics<parallel>, #tpu.dimension_semantics<arbitrary>], iteration_bounds = array<i64: 2, 1, 1>, scalar_prefetch = 0 : i64, scratch_operands = 0 : i64, tpu.core_type = #tpu.core_type<tc>, window_params = [{transform_indices = @transform_0, window_bounds = array<i64: 1, 64, 3>}, {transform_indices = @transform_1, window_bounds = array<i64: 1, 3, 64>}, {pipeline_mode = #tpu.pipeline_mode<synchronous>, transform_indices = @transform_2, window_bounds = array<i64: 1, 128>}, {transform_indices = @transform_3, window_bounds = array<i64: 16, 1>}, {transform_indices = @transform_4, window_bounds = array<i64: 1, 16, 128>}]} {
    %c0_i32 = arith.constant 0 : i32
    %0 = arith.cmpi eq, %arg2, %c0_i32 : i32
    %1 = arith.extui %0 : i1 to i32
    %c0_i32_0 = arith.constant 0 : i32
    %2 = arith.cmpi ne, %1, %c0_i32_0 : i32
    scf.if %2 {
      %cst_26 = arith.constant 0.000000e+00 : f32
      %46 = vector.broadcast %cst_26 : f32 to vector<16x128xf32>
      %c0_27 = arith.constant 0 : index
      %c0_28 = arith.constant 0 : index
      %c0_29 = arith.constant 0 : index
      %47 = vector.load %arg7[%c0_27, %c0_28, %c0_29] : memref<1x16x128xf32, #tpu.memory_space<vmem>>, vector<1x16x128xf32>
      %48 = vector.shape_cast %47 : vector<1x16x128xf32> to vector<16x128xf32>
      %49 = vector.shape_cast %46 : vector<16x128xf32> to vector<1x16x128xf32>
      tpu.vector_store %arg7[%c0_27, %c0_28, %c0_29], %49 {strides = array<i32>} : memref<1x16x128xf32, #tpu.memory_space<vmem>>, vector<1x16x128xf32>,
    } else {
    }
    %c0 = arith.constant 0 : index
    %c0_1 = arith.constant 0 : index
    %c0_2 = arith.constant 0 : index
    %3 = vector.load %arg3[%c0, %c0_1, %c0_2] : memref<1x64x3xf32, #tpu.memory_space<vmem>>, vector<1x64x1xf32>
    %4 = vector.shape_cast %3 : vector<1x64x1xf32> to vector<64x1xf32>
    %c0_3 = arith.constant 0 : index
    %c0_4 = arith.constant 0 : index
    %c1 = arith.constant 1 : index
    %5 = vector.load %arg3[%c0_3, %c0_4, %c1] : memref<1x64x3xf32, #tpu.memory_space<vmem>>, vector<1x64x1xf32>
    %6 = vector.shape_cast %5 : vector<1x64x1xf32> to vector<64x1xf32>
    %c0_5 = arith.constant 0 : index
    %c0_6 = arith.constant 0 : index
    %c2 = arith.constant 2 : index
    %7 = vector.load %arg3[%c0_5, %c0_6, %c2] : memref<1x64x3xf32, #tpu.memory_space<vmem>>, vector<1x64x1xf32>
    %8 = vector.shape_cast %7 : vector<1x64x1xf32> to vector<64x1xf32>
    %c0_7 = arith.constant 0 : index
    %c0_8 = arith.constant 0 : index
    %9 = vector.load %arg5[%c0_7, %c0_8] : memref<1x128xf32, #tpu.memory_space<vmem>>, vector<1x128xf32>
    %10 = vector.broadcast %4 : vector<64x1xf32> to vector<64x128xf32>
    %11 = vector.broadcast %9 : vector<1x128xf32> to vector<64x128xf32>
    %12 = arith.mulf %10, %11 : vector<64x128xf32>
    %13 = vector.broadcast %6 : vector<64x1xf32> to vector<64x128xf32>
    %14 = arith.addf %12, %13 : vector<64x128xf32>
    %15 = vector.broadcast %9 : vector<1x128xf32> to vector<64x128xf32>
    %16 = arith.mulf %14, %15 : vector<64x128xf32>
    %17 = vector.broadcast %8 : vector<64x1xf32> to vector<64x128xf32>
    %18 = arith.addf %16, %17 : vector<64x128xf32>
    %19 = math.exp %18 : vector<64x128xf32>
    %20 = arith.truncf %19 : vector<64x128xf32> to vector<64x128xbf16>
    %c0_9 = arith.constant 0 : index
    %c0_10 = arith.constant 0 : index
    %c0_11 = arith.constant 0 : index
    %21 = vector.load %arg4[%c0_9, %c0_10, %c0_11] : memref<1x3x64xf32, #tpu.memory_space<vmem>>, vector<1x1x64xf32>
    %22 = vector.shape_cast %21 : vector<1x1x64xf32> to vector<1x64xf32>
    %c0_12 = arith.constant 0 : index
    %c1_13 = arith.constant 1 : index
    %c0_14 = arith.constant 0 : index
    %23 = vector.load %arg4[%c0_12, %c1_13, %c0_14] : memref<1x3x64xf32, #tpu.memory_space<vmem>>, vector<1x1x64xf32>
    %24 = vector.shape_cast %23 : vector<1x1x64xf32> to vector<1x64xf32>
    %c0_15 = arith.constant 0 : index
    %c2_16 = arith.constant 2 : index
    %c0_17 = arith.constant 0 : index
    %25 = vector.load %arg4[%c0_15, %c2_16, %c0_17] : memref<1x3x64xf32, #tpu.memory_space<vmem>>, vector<1x1x64xf32>
    %26 = vector.shape_cast %25 : vector<1x1x64xf32> to vector<1x64xf32>
    %c0_18 = arith.constant 0 : index
    %c0_19 = arith.constant 0 : index
    %27 = vector.load %arg6[%c0_18, %c0_19] : memref<16x1xf32, #tpu.memory_space<vmem>>, vector<16x1xf32>
    %28 = vector.broadcast %22 : vector<1x64xf32> to vector<16x64xf32>
    %29 = vector.broadcast %27 : vector<16x1xf32> to vector<16x64xf32>
    %30 = arith.mulf %28, %29 : vector<16x64xf32>
    %31 = vector.broadcast %24 : vector<1x64xf32> to vector<16x64xf32>
    %32 = arith.addf %30, %31 : vector<16x64xf32>
    %33 = vector.broadcast %27 : vector<16x1xf32> to vector<16x64xf32>
    %34 = arith.mulf %32, %33 : vector<16x64xf32>
    %35 = vector.broadcast %26 : vector<1x64xf32> to vector<16x64xf32>
    %36 = arith.addf %34, %35 : vector<16x64xf32>
    %37 = math.exp %36 : vector<16x64xf32>
    %38 = arith.truncf %37 : vector<16x64xf32> to vector<16x64xbf16>
    %c0_20 = arith.constant 0 : index
    %c0_21 = arith.constant 0 : index
    %c0_22 = arith.constant 0 : index
    %39 = vector.load %arg7[%c0_20, %c0_21, %c0_22] : memref<1x16x128xf32, #tpu.memory_space<vmem>>, vector<1x16x128xf32>
    %40 = vector.shape_cast %39 : vector<1x16x128xf32> to vector<16x128xf32>
    %cst = arith.constant dense<0.000000e+00> : vector<16x128xf32>
    %41 = tpu.matmul %38, %20, %cst {dimension_numbers = #tpu.dot_dimension_numbers<[1], [0], [0], [1], [0, 0, 1, 1], [], []>} : vector<16x64xbf16>, vector<64x128xbf16>, vector<16x128xf32> -> vector<16x128xf32>
    %42 = arith.addf %40, %41 : vector<16x128xf32>
    %c0_23 = arith.constant 0 : index
    %c0_24 = arith.constant 0 : index
    %c0_25 = arith.constant 0 : index
    %43 = vector.load %arg7[%c0_23, %c0_24, %c0_25] : memref<1x16x128xf32, #tpu.memory_space<vmem>>, vector<1x16x128xf32>
    %44 = vector.shape_cast %43 : vector<1x16x128xf32> to vector<16x128xf32>
    %45 = vector.shape_cast %42 : vector<16x128xf32> to vector<1x16x128xf32>
    tpu.vector_store %arg7[%c0_23, %c0_24, %c0_25], %45 {strides = array<i32>} : memref<1x16x128xf32, #tpu.memory_space<vmem>>, vector<1x16x128xf32>,
    return
  }
  func.func @transform_0(%arg0: i32, %arg1: i32, %arg2: i32) -> (i32, i32, i32) {
    %c0_i32 = arith.constant 0 : i32
    %c0_i32_0 = arith.constant 0 : i32
    return %arg0, %arg2, %c0_i32 : i32, i32, i32
  }
  func.func @transform_1(%arg0: i32, %arg1: i32, %arg2: i32) -> (i32, i32, i32) {
    %c0_i32 = arith.constant 0 : i32
    %c0_i32_0 = arith.constant 0 : i32
    return %arg0, %c0_i32, %arg2 : i32, i32, i32
  }
  func.func @transform_2(%arg0: i32, %arg1: i32, %arg2: i32) -> (i32, i32) {
    %c0_i32 = arith.constant 0 : i32
    %c0_i32_0 = arith.constant 0 : i32
    %c0_i32_1 = arith.constant 0 : i32
    return %c0_i32, %c0_i32_0 : i32, i32
  }
  func.func @transform_3(%arg0: i32, %arg1: i32, %arg2: i32) -> (i32, i32) {
    %c0_i32 = arith.constant 0 : i32
    %c0_i32_0 = arith.constant 0 : i32
    return %arg1, %c0_i32 : i32, i32
  }
  func.func @transform_4(%arg0: i32, %arg1: i32, %arg2: i32) -> (i32, i32, i32) {
    %c0_i32 = arith.constant 0 : i32
    %c0_i32_0 = arith.constant 0 : i32
    return %arg0, %arg1, %c0_i32 : i32, i32, i32
  }
}

</mosaic_0001>

<llo_original>
// kernel: tpu_custom_call.1
$region0: #{tpu_custom_call.1}
  #allocation0 [shape = 'u32[]', space=smem, size = 0x4, offset = 0x4, fixed_abs, tag = 'smem constant byte address 0x4 - core index']
  #allocation1 [shape = 'u32[72,128]{1,0:T(1,128)}', space=vmem, size = 0x9000, scoped, tag = 'internal scratch']
  %s0 = inlined_call_operand.vmem [shape: f32[2,64,3], index: 0, kind: input, shape index: {}]
  %s1 = inlined_call_operand.vmem [shape: f32[2,3,64], index: 1, kind: input, shape index: {}]
  %s2 = inlined_call_operand.vmem [shape: f32[1,128], index: 2, kind: input, shape index: {}]
  %s3 = inlined_call_operand.vmem [shape: f32[16,1], index: 3, kind: input, shape index: {}]
  %s4 = inlined_call_operand.hbm [shape: f32[2,16,128], index: 4, kind: output, shape index: {}]
  %s5 = sld [smem:[#allocation0]]
  $region53: #{tpu_custom_call.1} parent=0
    _
  %s7 = ssub.s32 1, %s5
  %s8 = scalar_select 0, %s7, %s5
  $region1: #{tpu_custom_call.1} parent=0
    #allocation2 [shape = 'u8[16384]{0}', space=vmem, size = 0x4000, scoped, tag = 'output window, operand 0']
    #allocation3 [shape = 's32[2]{0}', space=sflag, size = 0x8, scoped, tag = 'scoped memory for tpu_custom_call.1']
    %9 = vsyncpa [#allocation3], 0
    %s10 = scalar_lea.sflag [#allocation3], 1
    %11 = vsyncpa %s10, 0
    loop: start=0, step=1, limit=4
    $region2: #{tpu_custom_call.1} parent=1 // loop_pre_header
      _
    $region3: #{tpu_custom_call.1} parent=1 // loop_header
      %s13 = sphi 0, %s17
      %p14 = scmp.ge.s32.totalorder %s13, 4
      %s20 = sphi 0, %s39
      %s21 = sphi 0, %s35
      %s22 = sphi 0, %s31
      %s23 = sphi 0, %s20
      %s24 = sphi 0, %s21
      %s25 = sphi 0, %s22
      %s26 = sphi 0, %s23
      %s27 = sphi 0, %s24
      %s28 = sphi 0, %s25
      %s44 = sphi 0, %s46
      %s47 = sphi 0, %s44
      %s48 = sphi 0, %s47
      %s64 = sphi 0, %s48
      %s72 = sphi 0, %s74
      %s75 = sphi 0, %s72
      %s76 = sphi 0, %s75
      %s92 = sphi 0, %s76
      %s96 = sphi 0, %s96
      %s98 = sphi 0, %s96
      %s99 = sphi 0, %s98
      %s113 = sphi 0, %s99
      %s119 = sphi 0, %s121
      %s122 = sphi 0, %s119
      %s123 = sphi 0, %s122
      %s139 = sphi 0, %s123
      %s147 = sphi 0, %s149
      %s150 = sphi 0, %s147
      %s151 = sphi 0, %s150
      %s167 = sphi 0, %s151
    $region4: #{tpu_custom_call.1} parent=1 // loop_header_branch
      %16 = sbr.rel (%p14) target = $region8
    $region5: #{tpu_custom_call.1} parent=1 // loop_body
      %s18 = ssub.s32 %s13, 1
      %s19 = ssub.s32 %s13, 2
      %s29 = sadd.s32 1, %s22
      %p30 = scmp.ge.s32.totalorder %s29, 1
      %s31 = scalar_select %p30, 0, %s29
      %s32 = sadd.s32 1, %s21
      %s33 = scalar_select %p30, %s32, %s21
      %p34 = scmp.ge.s32.totalorder %s33, 1
      %s35 = scalar_select %p34, 0, %s33
      %s36 = sadd.s32 1, %s20
      %s37 = scalar_select %p34, %s36, %s20
      %p38 = scmp.ge.s32.totalorder %s37, 2
      %s39 = scalar_select %p38, 0, %s37
      %s40 = ssub.s32 %s20, %s39
      %s41 = ssub.s32 %s22, %s31
      %s42 = sor.u32 %s40, %s41
      %p43 = scmp.eq.s32.totalorder %s42, 0
      %s45 = sadd.s32 %s44, 1
      %s46 = scalar_select %p43, %s44, %s45
      %p49 = pneg %p43
      %p50 = scmp.eq.s32.totalorder %s13, 1
      %p51 = por %p49, %p50
      %p52 = scmp.ne.s32.totalorder %s44, %s47
      %p53 = scmp.eq.s32.totalorder %s13, 0
      %p54 = por %p52, %p53
      %p55 = scmp.ne.s32.totalorder %s44, %s47
      %p56 = scmp.eq.s32.totalorder %s18, 1
      %p57 = por %p55, %p56
      %p58 = scmp.ne.s32.totalorder %s47, %s48
      %p59 = scmp.eq.s32.totalorder %s18, 0
      %p60 = por %p58, %p59
      %p61 = scmp.ne.s32.totalorder %s47, %s48
      %p62 = scmp.eq.s32.totalorder %s19, 1
      %p63 = por %p61, %p62
      %p65 = scmp.ne.s32.totalorder %s48, %s64
      %p66 = scmp.eq.s32.totalorder %s19, 0
      %p67 = por %p65, %p66
      %s68 = ssub.s32 %s20, %s39
      %s69 = ssub.s32 %s22, %s31
      %s70 = sor.u32 %s68, %s69
      %p71 = scmp.eq.s32.totalorder %s70, 0
      %s73 = sadd.s32 %s72, 1
      %s74 = scalar_select %p71, %s72, %s73
      %p77 = pneg %p71
      %p78 = scmp.eq.s32.totalorder %s13, 1
      %p79 = por %p77, %p78
      %p80 = scmp.ne.s32.totalorder %s72, %s75
      %p81 = scmp.eq.s32.totalorder %s13, 0
      %p82 = por %p80, %p81
      %p83 = scmp.ne.s32.totalorder %s72, %s75
      %p84 = scmp.eq.s32.totalorder %s18, 1
      %p85 = por %p83, %p84
      %p86 = scmp.ne.s32.totalorder %s75, %s76
      %p87 = scmp.eq.s32.totalorder %s18, 0
      %p88 = por %p86, %p87
      %p89 = scmp.ne.s32.totalorder %s75, %s76
      %p90 = scmp.eq.s32.totalorder %s19, 1
      %p91 = por %p89, %p90
      %p93 = scmp.ne.s32.totalorder %s76, %s92
      %p94 = scmp.eq.s32.totalorder %s19, 0
      %p95 = por %p93, %p94
      %s97 = sadd.s32 %s96, 1
      %p100 = scmp.eq.s32.totalorder %s13, 1
      %p101 = scmp.ne.s32.totalorder %s96, %s98
      %p102 = scmp.eq.s32.totalorder %s13, 0
      %p103 = por %p101, %p102
      %p104 = scmp.ne.s32.totalorder %s96, %s98
      %p105 = scmp.eq.s32.totalorder %s18, 1
      %p106 = por %p104, %p105
      %p107 = scmp.ne.s32.totalorder %s98, %s99
      %p108 = scmp.eq.s32.totalorder %s18, 0
      %p109 = por %p107, %p108
      %p110 = scmp.ne.s32.totalorder %s98, %s99
      %p111 = scmp.eq.s32.totalorder %s19, 1
      %p112 = por %p110, %p111
      %p114 = scmp.ne.s32.totalorder %s99, %s113
      %p115 = scmp.eq.s32.totalorder %s19, 0
      %p116 = por %p114, %p115
      %s117 = ssub.s32 %s21, %s35
      %p118 = scmp.eq.s32.totalorder %s117, 0
      %s120 = sadd.s32 %s119, 1
      %s121 = scalar_select %p118, %s119, %s120
      %p124 = pneg %p118
      %p125 = scmp.eq.s32.totalorder %s13, 1
      %p126 = por %p124, %p125
      %p127 = scmp.ne.s32.totalorder %s119, %s122
      %p128 = scmp.eq.s32.totalorder %s13, 0
      %p129 = por %p127, %p128
      %p130 = scmp.ne.s32.totalorder %s119, %s122
      %p131 = scmp.eq.s32.totalorder %s18, 1
      %p132 = por %p130, %p131
      %p133 = scmp.ne.s32.totalorder %s122, %s123
      %p134 = scmp.eq.s32.totalorder %s18, 0
      %p135 = por %p133, %p134
      %p136 = scmp.ne.s32.totalorder %s122, %s123
      %p137 = scmp.eq.s32.totalorder %s19, 1
      %p138 = por %p136, %p137
      %p140 = scmp.ne.s32.totalorder %s123, %s139
      %p141 = scmp.eq.s32.totalorder %s19, 0
      %p142 = por %p140, %p141
      %s143 = ssub.s32 %s20, %s39
      %s144 = ssub.s32 %s21, %s35
      %s145 = sor.u32 %s143, %s144
      %p146 = scmp.eq.s32.totalorder %s145, 0
      %s148 = sadd.s32 %s147, 1
      %s149 = scalar_select %p146, %s147, %s148
      %p152 = pneg %p146
      %p153 = scmp.eq.s32.totalorder %s13, 1
      %p154 = por %p152, %p153
      %p155 = scmp.ne.s32.totalorder %s147, %s150
      %p156 = scmp.eq.s32.totalorder %s13, 0
      %p157 = por %p155, %p156
      %p158 = scmp.ne.s32.totalorder %s147, %s150
      %p159 = scmp.eq.s32.totalorder %s18, 1
      %p160 = por %p158, %p159
      %p161 = scmp.ne.s32.totalorder %s150, %s151
      %p162 = scmp.eq.s32.totalorder %s18, 0
      %p163 = por %p161, %p162
      %p164 = scmp.ne.s32.totalorder %s150, %s151
      %p165 = scmp.eq.s32.totalorder %s19, 1
      %p166 = por %p164, %p165
      %p168 = scmp.ne.s32.totalorder %s151, %s167
      %p169 = scmp.eq.s32.totalorder %s19, 0
      %p170 = por %p168, %p169
      %p171 = scmp.le.s32.totalorder 1, %s13
      %p172 = scmp.lt.s32.totalorder %s13, 3
      %p173 = pnand %p171, %p172
      %p174 = pneg %p173
      // Predicated region
      $region9: #{tpu_custom_call.1} parent=5 // pred_check
        _
      $region10: #{tpu_custom_call.1} parent=5 // pred_check_branch
        %176 = sbr.rel (%p173) target = $region12
      $region11: #{tpu_custom_call.1} parent=5 // pred_region
        %s177 = ssub.s32 %s13, 1
        // Predicated region
        $region13: #{tpu_custom_call.1} parent=11 // pred_check
          %p178 = pneg %p109
        $region14: #{tpu_custom_call.1} parent=11 // pred_check_branch
          %180 = sbr.rel (%p178) target = $region16
        $region15: #{tpu_custom_call.1} parent=11 // pred_region
          _
        $region16: #{tpu_custom_call.1} parent=11 // pred_fallthru
          _
        // Predicated region
        $region17: #{tpu_custom_call.1} parent=11 // pred_check
          %p181 = pneg %p135
        $region18: #{tpu_custom_call.1} parent=11 // pred_check_branch
          %183 = sbr.rel (%p181) target = $region20
        $region19: #{tpu_custom_call.1} parent=11 // pred_region
          %s184 = smul.u32 2, %s24
          %p185 = scmp.lt.s32.totalorder %s184, 1
          %s186 = scalar_select %p185, %s184, 1
          %s187 = smul.addr %s186, 8
          %s188 = scalar_lea.vmem %s3, %s187
          %s189 = smul.u32 2, %s24
        $region20: #{tpu_custom_call.1} parent=11 // pred_fallthru
          _
      $region12: #{tpu_custom_call.1} parent=5 // pred_fallthru
        _
      %p190 = scmp.lt.s32.totalorder %s13, 2
      // Predicated region
      $region21: #{tpu_custom_call.1} parent=5 // pred_check
        %p191 = pneg %p190
      $region22: #{tpu_custom_call.1} parent=5 // pred_check_branch
        %193 = sbr.rel (%p191) target = $region24
      $region23: #{tpu_custom_call.1} parent=5 // pred_region
        // Predicated region
        $region25: #{tpu_custom_call.1} parent=23 // pred_check
          %p194 = pneg %p54
        $region26: #{tpu_custom_call.1} parent=23 // pred_check_branch
          %196 = sbr.rel (%p194) target = $region28
        $region27: #{tpu_custom_call.1} parent=23 // pred_region
          %s197 = smul.u32 8, %s22
          %p198 = scmp.lt.s32.totalorder %s20, 1
          %s199 = scalar_select %p198, %s20, 1
          %p200 = scmp.lt.s32.totalorder %s197, 7
          %s201 = scalar_select %p200, %s197, 7
          %s202 = smul.addr %s199, 8
          %s203 = sadd.s32 %s201, %s202
          %s204 = smul.addr %s203, 8
          %s205 = scalar_lea.vmem %s0, %s204
          %s206 = smul.u32 8, %s22
        $region28: #{tpu_custom_call.1} parent=23 // pred_fallthru
          _
        // Predicated region
        $region29: #{tpu_custom_call.1} parent=23 // pred_check
          %p207 = pneg %p82
        $region30: #{tpu_custom_call.1} parent=23 // pred_check_branch
          %209 = sbr.rel (%p207) target = $region32
        $region31: #{tpu_custom_call.1} parent=23 // pred_region
          %p210 = scmp.lt.s32.totalorder %s20, 1
          %s211 = scalar_select %p210, %s20, 1
          %p212 = scmp.lt.s32.totalorder %s22, 0
          %s213 = scalar_select %p212, %s22, 0
          %s214 = sadd.s32 %s213, %s211
          %s215 = smul.addr %s214, 4
          %s216 = scalar_lea.vmem %s1, %s215
        $region32: #{tpu_custom_call.1} parent=23 // pred_fallthru
          _
      $region24: #{tpu_custom_call.1} parent=5 // pred_fallthru
        _
      %p217 = scmp.le.s32.totalorder 1, %s13
      %p218 = scmp.lt.s32.totalorder %s13, 3
      %p219 = pnand %p217, %p218
      %p220 = pneg %p219
      // Predicated region
      $region33: #{tpu_custom_call.1} parent=5 // pred_check
        _
      $region34: #{tpu_custom_call.1} parent=5 // pred_check_branch
        %222 = sbr.rel (%p219) target = $region36
      $region35: #{tpu_custom_call.1} parent=5 // pred_region
        %s223 = ssub.s32 %s13, 1
        %s224 = smul.u32 8, %s25
        %p225 = scmp.lt.s32.totalorder %s23, 1
        %s226 = scalar_select %p225, %s23, 1
        %p227 = scmp.lt.s32.totalorder %s224, 7
        %s228 = scalar_select %p227, %s224, 7
        %s229 = smul.addr %s226, 8
        %s230 = sadd.s32 %s228, %s229
        %s231 = smul.addr %s230, 8
        %s232 = scalar_lea.vmem %s0, %s231
        %p233 = pneg %p60
        %p234 = pneg %p57
        %p235 = scmp.lt.s32.totalorder %s23, 1
        %s236 = scalar_select %p235, %s23, 1
        %p237 = scmp.lt.s32.totalorder %s25, 0
        %s238 = scalar_select %p237, %s25, 0
        %s239 = sadd.s32 %s238, %s236
        %s240 = smul.addr %s239, 4
        %s241 = scalar_lea.vmem %s1, %s240
        %p242 = pneg %p88
        %p243 = pneg %p85
        %p244 = pneg %p109
        %p245 = pneg %p106
        %s246 = smul.u32 2, %s24
        %p247 = scmp.lt.s32.totalorder %s246, 1
        %s248 = scalar_select %p247, %s246, 1
        %s249 = smul.addr %s248, 8
        %s250 = scalar_lea.vmem %s3, %s249
        %p251 = pneg %p135
        %p252 = pneg %p132
        %p253 = pneg %p163
        %p254 = pneg %p160
        %s255 = sand.u32 %s150, 1
        %s256 = scalar_lea.sflag [#allocation3], %s255
        %s257 = sand.u32 %s150, 1
        %s258 = smul.addr %s257, 16
        %s259 = scalar_lea.vmem [#allocation2], %s258
        %s260 = smul.u32 8, %s25
        %p261 = scmp.lt.s32.totalorder %s23, 1
        %s262 = scalar_select %p261, %s23, 1
        %p263 = scmp.lt.s32.totalorder %s260, 7
        %s264 = scalar_select %p263, %s260, 7
        %s265 = smul.addr %s262, 8
        %s266 = sadd.s32 %s264, %s265
        %s267 = smul.addr %s266, 8
        %s268 = scalar_lea.vmem %s0, %s267
        %s269 = smul.u32 8, %s25
        %p270 = scmp.lt.s32.totalorder %s23, 1
        %s271 = scalar_select %p270, %s23, 1
        %p272 = scmp.lt.s32.totalorder %s25, 0
        %s273 = scalar_select %p272, %s25, 0
        %s274 = sadd.s32 %s273, %s271
        %s275 = smul.addr %s274, 4
        %s276 = scalar_lea.vmem %s1, %s275
        %s277 = smul.u32 2, %s24
        %p278 = scmp.lt.s32.totalorder %s277, 1
        %s279 = scalar_select %p278, %s277, 1
        %s280 = smul.addr %s279, 8
        %s281 = scalar_lea.vmem %s3, %s280
        %s282 = smul.u32 2, %s24
        %s283 = smul.u32 2, %s24
        %p285 = scmp.eq.s32.totalorder %s25, 0
        // Predicated region
        $region37: #{tpu_custom_call.1} parent=35 // pred_check
          %p286 = pneg %p285
        $region38: #{tpu_custom_call.1} parent=35 // pred_check_branch
          %288 = sbr.rel (%p286) target = $region40
        $region39: #{tpu_custom_call.1} parent=35 // pred_region
          %289 = vst [vmem:[%s259] sm:$0xff] 0.0
          %290 = vst [vmem:[%s259 + $0x8] sm:$0xff] 0.0
        $region40: #{tpu_custom_call.1} parent=35 // pred_fallthru
          _
        %v291 = vld [vmem:[%s268] sm:$0xff]
        %v292 = vld [vmem:[%s268 + $0x8] sm:$0xff]
        %v293 = vld [vmem:[%s268 + $0x10] sm:$0xff]
        %v294 = vld [vmem:[%s268 + $0x18] sm:$0xff]
        %v295 = vld [vmem:[%s268 + $0x20] sm:$0xff]
        %v296 = vld [vmem:[%s268 + $0x28] sm:$0xff]
        %v297 = vld [vmem:[%s268 + $0x30] sm:$0xff]
        %v298 = vld [vmem:[%s268 + $0x38] sm:$0xff]
        %v299 = vld [vmem:[%s2] sm:$0x1]
        %301 = vset.pattern.permute.xlu0 0
        %302 = vperm.xlu0 %301, %v291
        %v303 = vpop.permute.xlu0 %302
        %306 = vset.pattern.permute.xlu0 0
        %307 = vperm.xlu0 %306, %v292
        %v308 = vpop.permute.xlu0 %307
        %311 = vset.pattern.permute.xlu0 0
        %312 = vperm.xlu0 %311, %v293
        %v313 = vpop.permute.xlu0 %312
        %316 = vset.pattern.permute.xlu0 0
        %317 = vperm.xlu0 %316, %v294
        %v318 = vpop.permute.xlu0 %317
        %321 = vset.pattern.permute.xlu0 0
        %322 = vperm.xlu0 %321, %v295
        %v323 = vpop.permute.xlu0 %322
        %326 = vset.pattern.permute.xlu0 0
        %327 = vperm.xlu0 %326, %v296
        %v328 = vpop.permute.xlu0 %327
        %331 = vset.pattern.permute.xlu0 0
        %332 = vperm.xlu0 %331, %v297
        %v333 = vpop.permute.xlu0 %332
        %336 = vset.pattern.permute.xlu0 0
        %337 = vperm.xlu0 %336, %v298
        %v338 = vpop.permute.xlu0 %337
        %v341 = vperm.slane %v299, 0
        %v343 = vmul.f32 %v303, %v341
        %v344 = vmul.f32 %v308, %v341
        %v345 = vmul.f32 %v313, %v341
        %v346 = vmul.f32 %v318, %v341
        %v347 = vmul.f32 %v323, %v341
        %v348 = vmul.f32 %v328, %v341
        %v349 = vmul.f32 %v333, %v341
        %v350 = vmul.f32 %v338, %v341
        %351 = vset.pattern.permute.xlu0 1
        %352 = vperm.xlu0 %351, %v291
        %v353 = vpop.permute.xlu0 %352
        %355 = vset.pattern.permute.xlu0 1
        %356 = vperm.xlu0 %355, %v292
        %v357 = vpop.permute.xlu0 %356
        %359 = vset.pattern.permute.xlu0 1
        %360 = vperm.xlu0 %359, %v293
        %v361 = vpop.permute.xlu0 %360
        %363 = vset.pattern.permute.xlu0 1
        %364 = vperm.xlu0 %363, %v294
        %v365 = vpop.permute.xlu0 %364
        %367 = vset.pattern.permute.xlu0 1
        %368 = vperm.xlu0 %367, %v295
        %v369 = vpop.permute.xlu0 %368
        %371 = vset.pattern.permute.xlu0 1
        %372 = vperm.xlu0 %371, %v296
        %v373 = vpop.permute.xlu0 %372
        %375 = vset.pattern.permute.xlu0 1
        %376 = vperm.xlu0 %375, %v297
        %v377 = vpop.permute.xlu0 %376
        %379 = vset.pattern.permute.xlu0 1
        %380 = vperm.xlu0 %379, %v298
        %v381 = vpop.permute.xlu0 %380
        %v383 = vadd.f32 %v343, %v353
        %v384 = vadd.f32 %v344, %v357
        %v385 = vadd.f32 %v345, %v361
        %v386 = vadd.f32 %v346, %v365
        %v387 = vadd.f32 %v347, %v369
        %v388 = vadd.f32 %v348, %v373
        %v389 = vadd.f32 %v349, %v377
        %v390 = vadd.f32 %v350, %v381
        %v391 = vmul.f32 %v383, %v341
        %v392 = vmul.f32 %v384, %v341
        %v393 = vmul.f32 %v385, %v341
        %v394 = vmul.f32 %v386, %v341
        %v395 = vmul.f32 %v387, %v341
        %v396 = vmul.f32 %v388, %v341
        %v397 = vmul.f32 %v389, %v341
        %v398 = vmul.f32 %v390, %v341
        %399 = vset.pattern.permute.xlu0 2
        %400 = vperm.xlu0 %399, %v291
        %v401 = vpop.permute.xlu0 %400
        %403 = vset.pattern.permute.xlu0 2
        %404 = vperm.xlu0 %403, %v292
        %v405 = vpop.permute.xlu0 %404
        %407 = vset.pattern.permute.xlu0 2
        %408 = vperm.xlu0 %407, %v293
        %v409 = vpop.permute.xlu0 %408
        %411 = vset.pattern.permute.xlu0 2
        %412 = vperm.xlu0 %411, %v294
        %v413 = vpop.permute.xlu0 %412
        %415 = vset.pattern.permute.xlu0 2
        %416 = vperm.xlu0 %415, %v295
        %v417 = vpop.permute.xlu0 %416
        %419 = vset.pattern.permute.xlu0 2
        %420 = vperm.xlu0 %419, %v296
        %v421 = vpop.permute.xlu0 %420
        %423 = vset.pattern.permute.xlu0 2
        %424 = vperm.xlu0 %423, %v297
        %v425 = vpop.permute.xlu0 %424
        %427 = vset.pattern.permute.xlu0 2
        %428 = vperm.xlu0 %427, %v298
        %v429 = vpop.permute.xlu0 %428
        %v431 = vadd.f32 %v391, %v401
        %v432 = vadd.f32 %v392, %v405
        %v433 = vadd.f32 %v393, %v409
        %v434 = vadd.f32 %v394, %v413
        %v435 = vadd.f32 %v395, %v417
        %v436 = vadd.f32 %v396, %v421
        %v437 = vadd.f32 %v397, %v425
        %v438 = vadd.f32 %v398, %v429
        %v439 = vmul.f32 %v431, 1.442695
        %v440 = vpow.pop %v439
        %v441 = vmul.f32 %v432, 1.442695
        %v442 = vpow.pop %v441
        %v443 = vmul.f32 %v433, 1.442695
        %v444 = vpow.pop %v443
        %v445 = vmul.f32 %v434, 1.442695
        %v446 = vpow.pop %v445
        %v447 = vmul.f32 %v435, 1.442695
        %v448 = vpow.pop %v447
        %v449 = vmul.f32 %v436, 1.442695
        %v450 = vpow.pop %v449
        %v451 = vmul.f32 %v437, 1.442695
        %v452 = vpow.pop %v451
        %v453 = vmul.f32 %v438, 1.442695
        %v454 = vpow.pop %v453
        %v455 = vpack.c.bf16 %v442, %v440
        %v456 = vpack.c.bf16 %v446, %v444
        %v457 = vpack.c.bf16 %v450, %v448
        %v458 = vpack.c.bf16 %v454, %v452
        %v459 = vld [vmem:[%s276] sm:$0x1]
        %v460 = vld [vmem:[%s276 + $0x1] sm:$0x1]
        %v461 = vld [vmem:[%s276 + $0x2] sm:$0x1]
        %v462 = vld [vmem:[%s281] sm:$0xff]
        %v463 = vld [vmem:[%s281 + $0x8] sm:$0xff]
        %v464 = vperm.slane %v459, 0
        %466 = vset.pattern.permute.xlu0 0
        %467 = vperm.xlu0 %466, %v462
        %v468 = vpop.permute.xlu0 %467
        %471 = vset.pattern.permute.xlu0 0
        %472 = vperm.xlu0 %471, %v463
        %v473 = vpop.permute.xlu0 %472
        %v475 = vmul.f32 %v464, %v468
        %v476 = vmul.f32 %v464, %v473
        %v477 = vperm.slane %v460, 0
        %v478 = vadd.f32 %v475, %v477
        %v479 = vadd.f32 %v476, %v477
        %v480 = vmul.f32 %v478, %v468
        %v481 = vmul.f32 %v479, %v473
        %v482 = vperm.slane %v461, 0
        %v483 = vadd.f32 %v480, %v482
        %v484 = vadd.f32 %v481, %v482
        %v485 = vmul.f32 %v483, 1.442695
        %v486 = vpow.pop %v485
        %v487 = vmul.f32 %v484, 1.442695
        %v488 = vpow.pop %v487
        %v489 = vpack.c.bf16 %v488, %v486
        %v490 = vld [vmem:[%s259] sm:$0xff]
        %v491 = vld [vmem:[%s259 + $0x8] sm:$0xff]
        %vm492 = vcmask 523264
        %v494 = vsel %vm492, %v489, 0
        %496 = vmatpush.bf16.msra.mxu0 0
        %497 = vmatpush.bf16.msra.mxu0 0
        %498 = vmatpush.bf16.msra.mxu0 0
        %499 = vmatpush.bf16.msra.mxu0 0
        %500 = vmatpush.bf16.msra.mxu0 %v458
        %501 = vmatpush.bf16.msra.mxu0 %v457
        %502 = vmatpush.bf16.msra.mxu0 %v456
        %503 = vmatpush.bf16.msra.mxu0 %v455
        %504 = vmatmul.bf16.gmra.mxu0 %v494
        %v505 = vpop.f32.mrf.mxu0
        %v506 = vadd.f32 0.0, %v505
        %v507 = vpop.f32.mrf.mxu0
        %v508 = vadd.f32 0.0, %v507
        %509 = vdwg.mxu0
        %v510 = vadd.f32 %v490, %v506
        %v511 = vadd.f32 %v491, %v508
        %512 = vst [vmem:[%s259] sm:$0xff] %v510
        %513 = vst [vmem:[%s259 + $0x8] sm:$0xff] %v511
        %s514 = sand.u32 %s150, 1
        %s515 = scalar_lea.sflag [#allocation3], %s514
        %s516 = sand.u32 %s150, 1
        %s517 = smul.addr %s516, 16
        %s518 = scalar_lea.vmem [#allocation2], %s517
        // Predicated region
        $region41: #{tpu_custom_call.1} parent=35 // pred_check
          %p519 = pneg %p160
        $region42: #{tpu_custom_call.1} parent=35 // pred_check_branch
          %521 = sbr.rel (%p519) target = $region44
        $region43: #{tpu_custom_call.1} parent=35 // pred_region
          %s522 = smul.u32 2, %s24
          %524 = vsyncadd %s515, 0
          %s525 = smul.addr %s23, 2
          %s526 = sadd.s32 %s522, %s525
          %s527 = smul.addr %s526, 8
          %s528 = scalar_lea.hbm %s4, %s527
          %s529 = sshll.u32 %s518, 4
          %s530 = int_to_ptr.vmem [resolvable:$true] %s529
          %s531 = sshll.u32 %s528, 4
          %s532 = int_to_ptr.hbm [resolvable:$true] %s531
          %537 = dma.vmem_to_hbm [thread:$0]  %s530, 256, %s532, %s515, 128, 128, 8
        $region44: #{tpu_custom_call.1} parent=35 // pred_fallthru
          _
      $region36: #{tpu_custom_call.1} parent=5 // pred_fallthru
        _
      %p538 = scmp.le.s32.totalorder 2, %s13
      // Predicated region
      $region45: #{tpu_custom_call.1} parent=5 // pred_check
        %p539 = pneg %p538
      $region46: #{tpu_custom_call.1} parent=5 // pred_check_branch
        %541 = sbr.rel (%p539) target = $region48
      $region47: #{tpu_custom_call.1} parent=5 // pred_region
        %s542 = ssub.s32 %s13, 2
        // Predicated region
        $region49: #{tpu_custom_call.1} parent=47 // pred_check
          %p543 = pneg %p166
        $region50: #{tpu_custom_call.1} parent=47 // pred_check_branch
          %545 = sbr.rel (%p543) target = $region52
        $region51: #{tpu_custom_call.1} parent=47 // pred_region
          %s546 = sand.u32 %s151, 1
          %s547 = scalar_lea.sflag [#allocation3], %s546
          %s548 = sand.u32 %s151, 1
          %s549 = smul.addr %s548, 16
          %s550 = scalar_lea.vmem [#allocation2], %s549
          %552 = dma.done %s547, 256
        $region52: #{tpu_custom_call.1} parent=47 // pred_fallthru
          _
      $region48: #{tpu_custom_call.1} parent=5 // pred_fallthru
        _
    $region6: #{tpu_custom_call.1} parent=1 // loop_footer
      %s17 = sadd.s32 1, %s13
    $region7: #{tpu_custom_call.1} parent=1 // loop_footer_branch
      %12 = sbr.rel target = $region3
    $region8: #{tpu_custom_call.1} parent=1 // loop_exit
      _
    %553 = vsyncpa [#allocation3], 1
    %s554 = scalar_lea.sflag [#allocation3], 1
    %555 = vsyncpa %s554, 1

</llo_original>
